<compile_context>
chip_gen: v5e
topology: v5e:2x2
jax: 0.10.0
libtpu: 0.0.40
codegen_flags: <defaults>
</compile_context>

<pallas_src>
import math
from dataclasses import dataclass
from typing import Any, Tuple

import numpy as np
import jax
import jax.numpy as jnp
from jax.experimental import pallas as pl
from jax.experimental.pallas import tpu as pltpu


# --------------------------------------------------------------------------- #
# helpers
# --------------------------------------------------------------------------- #
def _round_up(x: int, m: int) -> int:
    return (x + m - 1) // m * m


def _cdiv(a: int, b: int) -> int:
    return -(-a // b)


def _pad_feature(d: int) -> int:
    # Feature (K/N) axes >= 256 are padded to multiples of 256 so every MXU pass
    # on v6e/v7x (256x256 arrays) sees full-width tiles; below that the 128-lane
    # granule is enough (v5e's 128x128 MXUs are indifferent, and tiny dims are
    # overhead-bound anyway so extra zero FLOPs would be pure waste).
    return _round_up(d, 256) if d >= 256 else _round_up(d, 128)


def _vmem_budget_bytes() -> int:
    # Generation-aware budget: v7x has only 64 MiB per TensorCore vs 128 MiB on
    # v5e/v6e.  Leave ~25% headroom for compiler scratch / semaphores.
    phys = 64 << 20                      # conservative default (v7x)
    try:
        info = pltpu.get_tpu_info()
        phys = int(getattr(info, "vmem_capacity_bytes", phys))
    except Exception:
        pass
    return (phys * 3) // 4


# --------------------------------------------------------------------------- #
# kernel
# --------------------------------------------------------------------------- #
def mlp_kernel(x_ref, *refs):
    """Fused MLP forward.  refs = (w0, b0, w1, b1, ..., wL, bL, out_ref).

    x / w refs hold the MXU operand dtype (bf16 or f32); biases are f32.  The
    bias-add + ReLU epilogue runs in f32 on the VPU (v5e has no bf16 VPU/EUP)
    and is cast back to the operand dtype only to feed the next matmul.
    """
    out_ref = refs[-1]
    wb = refs[:-1]
    n_total = len(wb) // 2
    op_dtype = x_ref.dtype

    h = x_ref[...]
    for l in range(n_total):                           # unrolled at trace time
        w = wb[2 * l][...]
        b = wb[2 * l + 1][...]                         # f32 [1, d_out_p] -> broadcasts over rows
        acc = jnp.dot(h, w, preferred_element_type=jnp.float32) + b
        if l < n_total - 1:                            # ReLU on all but the final layer
            h = jnp.maximum(acc, 0.0).astype(op_dtype)
        else:
            out_ref[...] = acc.astype(out_ref.dtype)


# --------------------------------------------------------------------------- #
# parameter preparation (done ONCE, outside the per-call wrapper)
# --------------------------------------------------------------------------- #
@dataclass(frozen=True)
class PreparedMLP:
    layers: Tuple[Tuple[Any, Any], ...]   # ((w_p, b_p), ...) padded, op-dtype W, f32 b
    d_in: int
    d_in_p: int
    d_out: int
    d_out_p: int
    max_dim_p: int
    operand_dtype: Any
    param_bytes: int


def prepare_mlp_params(params, operand_dtype=jnp.bfloat16) -> PreparedMLP:
    """params: list of (w [d_in, d_out] == torch weight.T, b [1, d_out]) per layer.

    Pads every feature axis to a lane-dense size and casts weights to the MXU
    operand dtype.  Call once and reuse the result across forward calls.
    """
    op_size = np.dtype(operand_dtype).itemsize
    d_in = int(params[0][0].shape[0])
    d_in_p = _pad_feature(d_in)

    layers = []
    prev, prev_p = d_in, d_in_p
    max_dim_p = d_in_p
    param_bytes = 0
    for w, b in params:
        di, do = int(w.shape[0]), int(w.shape[1])
        assert di == prev, f"layer input dim {di} != previous output dim {prev}"
        do_p = _pad_feature(do)
        w_p = jnp.zeros((prev_p, do_p), operand_dtype).at[:di, :do].set(
            w.astype(operand_dtype))
        b_p = jnp.zeros((1, do_p), jnp.float32).at[:, :do].set(
            jnp.reshape(b, (1, -1)).astype(jnp.float32))
        layers.append((w_p, b_p))
        param_bytes += w_p.size * op_size + b_p.size * 4
        prev, prev_p = do, do_p
        max_dim_p = max(max_dim_p, do_p)

    return PreparedMLP(tuple(layers), d_in, d_in_p, prev, prev_p, max_dim_p,
                       operand_dtype, int(param_bytes))


# --------------------------------------------------------------------------- #
# batch tiling
# --------------------------------------------------------------------------- #
def _choose_tm(B: int, sublane: int, rows_cap: int) -> int:
    rows_cap = max(sublane, (rows_cap // sublane) * sublane)
    if B <= 256:
        # One tall block: for small batches a single block beats starved slivers.
        tm = _round_up(B, sublane)
    else:
        # >= 8 pipeline steps when B allows (hides x/out DMAs behind MXU work),
        # but never drop below 128 rows per block.
        tm = max(128, _round_up(_cdiv(B, 8), sublane))
    tm = min(tm, 512, rows_cap)
    return max(sublane, (tm // sublane) * sublane)


# --------------------------------------------------------------------------- #
# forward wrapper
# --------------------------------------------------------------------------- #
def mlp_forward(x, prep: PreparedMLP, *, tm=None, out_dtype=None):
    """x: [..., d_in].  Returns [..., d_out] with the module's forward semantics."""
    lead = x.shape[:-1]
    x2 = x.reshape(-1, x.shape[-1])
    B, d_in = x2.shape
    assert d_in == prep.d_in, (d_in, prep.d_in)

    op_dtype = prep.operand_dtype
    op_size = np.dtype(op_dtype).itemsize
    out_dtype = out_dtype or x.dtype
    out_size = np.dtype(out_dtype).itemsize
    d_in_p, d_out_p = prep.d_in_p, prep.d_out_p

    # ---- VMEM budget: double-buffered x/out blocks + activations + resident params
    budget = _vmem_budget_bytes()
    per_row = (2 * d_in_p * op_size                       # double-buffered x block
               + 2 * d_out_p * out_size                   # double-buffered out block
               + prep.max_dim_p * (4 + 2 * op_size))      # f32 acc + op-dtype activations
    fixed = prep.param_bytes + (4 << 20)                  # resident params + slack
    rows_cap = (budget - fixed) // per_row
    if rows_cap < 8:
        # TODO(synk): weight-streaming path (pl.ANY + double-buffered DMA reused
        # across layers) for params that don't fit in VMEM (big d_hidden on v7x).
        raise NotImplementedError(
            "MLP parameters do not fit in VMEM for this generation; "
            "weight streaming is not implemented yet.")

    sublane = max(8, 32 // op_size)                       # 8 rows f32, 16 rows bf16
    if tm is None:
        tm = _choose_tm(B, sublane, int(rows_cap))
    else:
        tm = max(sublane, _round_up(int(tm), sublane))

    n_blocks = _cdiv(B, tm)
    if n_blocks >= 3 and n_blocks % 2 == 1:
        # Prefer an even number of "parallel" steps so both v7x TensorCores get
        # equal work (neutral on single-TC v5e/v6e).
        tm_alt = max(sublane, _round_up(_cdiv(B, n_blocks + 1), sublane))
        if tm_alt <= tm and _cdiv(B, tm_alt) % 2 == 0:
            tm = tm_alt
            n_blocks = _cdiv(B, tm)
    B_p = n_blocks * tm

    # ---- pad/cast x only when actually needed (zero rows/cols are neutral) ----
    if B_p == B and d_in_p == d_in:
        x_p = x2 if x2.dtype == op_dtype else x2.astype(op_dtype)
    else:
        x_p = jnp.zeros((B_p, d_in_p), op_dtype).at[:B, :d_in].set(
            x2.astype(op_dtype))

    # ---- scheduling hints -----------------------------------------------------
    flops = int(2 * B_p * sum(w.shape[0] * w.shape[1] for w, _ in prep.layers))
    bytes_accessed = int(x_p.size * op_size + prep.param_bytes
                         + B_p * d_out_p * out_size)
    vmem_est = int(tm * per_row + prep.param_bytes)
    vmem_limit = int(min(budget, max(32 << 20, vmem_est + (4 << 20))))

    def _run(single_buffer_params: bool):
        param_kw = ({"pipeline_mode": pl.Buffered(1)}    # resident, single buffer
                    if single_buffer_params else {})
        flat = []
        in_specs = [pl.BlockSpec((tm, d_in_p), lambda i: (i, 0))]
        for w_p, b_p in prep.layers:
            flat += [w_p, b_p]
            # Constant index maps -> params fetched once, stay resident across
            # all grid steps.
            in_specs.append(pl.BlockSpec(w_p.shape, lambda i: (0, 0), **param_kw))
            in_specs.append(pl.BlockSpec(b_p.shape, lambda i: (0, 0), **param_kw))
        return pl.pallas_call(
            mlp_kernel,
            out_shape=jax.ShapeDtypeStruct((B_p, d_out_p), out_dtype),
            grid=(n_blocks,),
            in_specs=in_specs,
            out_specs=pl.BlockSpec((tm, d_out_p), lambda i: (i, 0)),
            compiler_params=pltpu.CompilerParams(
                dimension_semantics=("parallel",),
                vmem_limit_bytes=vmem_limit),
            cost_estimate=pl.CostEstimate(flops=flops, transcendentals=0,
                                          bytes_accessed=bytes_accessed),
        )(x_p, *flat)

    try:
        out_p = _run(single_buffer_params=True)
    except Exception:
        # Fallback: if this jax/Mosaic version rejects Buffered(1), use default
        # double-buffered specs (constant index maps still avoid re-DMA).
        out_p = _run(single_buffer_params=False)

    out = out_p[:B, :prep.d_out]
    return out.reshape(*lead, prep.d_out)


# --------------------------------------------------------------------------- #
# synthetic init mirroring the PyTorch module + pure-JAX reference
# --------------------------------------------------------------------------- #
def init_params(key, d_in, n_layers, d_hidden, d_out):
    """Hidden layers: trunc-normal ('default'), bias = 0.  Final: 'final' -> all 0.
    Weights stored as [d_in, d_out] (torch weight.T); biases as [1, d_out]."""
    TRUNCATED_NORMAL_STDDEV_FACTOR = 0.8796256610342398
    dims = [(d_in, d_hidden)] + [(d_hidden, d_hidden)] * n_layers

    params = []
    for fan_in, fan_out in dims:
        key, k = jax.random.split(key)
        std = math.sqrt(1.0 / max(1, fan_in)) / TRUNCATED_NORMAL_STDDEV_FACTOR
        w = std * jax.random.truncated_normal(k, -2.0, 2.0, (fan_in, fan_out), jnp.float32)
        b = jnp.zeros((1, fan_out), jnp.float32)
        params.append((w, b))

    params.append((jnp.zeros((d_hidden, d_out), jnp.float32),
                   jnp.zeros((1, d_out), jnp.float32)))
    return params


def mlp_reference(x, params, operand_dtype=jnp.float32, precision=None):
    """Pure-JAX reference mirroring the kernel numerics (operand dtype + f32 acc)."""
    h = x.astype(operand_dtype)
    n = len(params)
    out = None
    for l, (w, b) in enumerate(params):
        acc = jnp.dot(h, w.astype(operand_dtype),
                      preferred_element_type=jnp.float32, precision=precision)
        acc = acc + jnp.reshape(b, (1, -1)).astype(jnp.float32)
        if l < n - 1:
            h = jnp.maximum(acc, 0.0).astype(operand_dtype)
        else:
            out = acc
    return out.astype(x.dtype)


# --------------------------------------------------------------------------- #
# main
# --------------------------------------------------------------------------- #
if __name__ == "__main__":
    # MLP(d_in=32, n_layers=2, d_hidden=32, d_out=16, ReLU, bias=True, final_init='final')
    B, d_in, n_layers, d_hidden, d_out = 8, 32, 2, 32, 16

    key = jax.random.PRNGKey(0)
    kx, kp, kf = jax.random.split(key, 3)
    x = jax.random.normal(kx, (B, d_in), dtype=jnp.float32)
    params = init_params(kp, d_in, n_layers, d_hidden, d_out)

    # (a) Module-faithful config: 'final' init zeroes the last layer, so the exact
    #     output is 0 regardless of matmul precision -- validates all the plumbing.
    prep_f32 = prepare_mlp_params(params, operand_dtype=jnp.float32)
    out = jax.block_until_ready(mlp_forward(x, prep_f32))
    assert out.shape == (B, d_out), out.shape
    assert float(jnp.max(jnp.abs(out))) < 1e-6, "zero-init final layer must give 0"

    # (b) Non-zero final layer so the last GEMM is actually exercised (the zero-init
    #     config would hide bugs and over-credit any benchmark numbers).
    w_last = 0.1 * jax.random.normal(kf, (d_hidden, d_out), jnp.float32)
    b_last = jnp.full((1, d_out), 0.25, jnp.float32)
    params_nz = params[:-1] + [(w_last, b_last)]
    ref_f32 = mlp_reference(x, params_nz, jnp.float32,
                            precision=jax.lax.Precision.HIGHEST)

    prep_nz_f32 = prepare_mlp_params(params_nz, operand_dtype=jnp.float32)
    out_f32 = jax.block_until_ready(mlp_forward(x, prep_nz_f32))
    assert jnp.allclose(out_f32, ref_f32, atol=2e-2, rtol=2e-2), "f32 path mismatch"

    prep_nz_bf16 = prepare_mlp_params(params_nz, operand_dtype=jnp.bfloat16)
    out_bf16 = jax.block_until_ready(mlp_forward(x, prep_nz_bf16))
    ref_bf16 = mlp_reference(x, params_nz, jnp.bfloat16)
    assert jnp.allclose(out_bf16, ref_bf16, atol=3e-2, rtol=3e-2), "bf16 path mismatch"
    assert jnp.allclose(out_bf16, ref_f32, atol=1.5e-1, rtol=1.5e-1), "bf16 vs f32 drift"

    # (c) Ragged batch (B not a multiple of the sublane): zero-padded remainder rows,
    #     single tall block (>=128-row preference) instead of starved 32-row tiles.
    B2 = 50
    x2 = jax.random.normal(kx, (B2, d_in), dtype=jnp.float32)
    out2 = jax.block_until_ready(mlp_forward(x2, prep_nz_f32))
    ref2 = mlp_reference(x2, params_nz, jnp.float32,
                         precision=jax.lax.Precision.HIGHEST)
    assert out2.shape == (B2, d_out), out2.shape
    assert jnp.allclose(out2, ref2, atol=2e-2, rtol=2e-2), "ragged-batch mismatch"

    print("KERNEL_OK")
</pallas_src>

<mosaic_0001>
module attributes {stable_mosaic.version = 11 : i64} {
  func.func @mlp_kernel(%arg0: i32, %arg1: memref<8x128xf32, #tpu.memory_space<vmem>>, %arg2: memref<128x128xf32, #tpu.memory_space<vmem>>, %arg3: memref<1x128xf32, #tpu.memory_space<vmem>>, %arg4: memref<128x128xf32, #tpu.memory_space<vmem>>, %arg5: memref<1x128xf32, #tpu.memory_space<vmem>>, %arg6: memref<128x128xf32, #tpu.memory_space<vmem>>, %arg7: memref<1x128xf32, #tpu.memory_space<vmem>>, %arg8: memref<128x128xf32, #tpu.memory_space<vmem>>, %arg9: memref<1x128xf32, #tpu.memory_space<vmem>>, %arg10: memref<8x128xf32, #tpu.memory_space<vmem>>) attributes {dimension_semantics = [#tpu.dimension_semantics<parallel>], iteration_bounds = array<i64: 1>, scalar_prefetch = 0 : i64, scratch_operands = 0 : i64, tpu.core_type = #tpu.core_type<tc>, window_params = [{transform_indices = @transform_0, window_bounds = array<i64: 8, 128>}, {pipeline_mode = #tpu.pipeline_mode<synchronous>, transform_indices = @transform_1, window_bounds = array<i64: 128, 128>}, {pipeline_mode = #tpu.pipeline_mode<synchronous>, transform_indices = @transform_2, window_bounds = array<i64: 1, 128>}, {pipeline_mode = #tpu.pipeline_mode<synchronous>, transform_indices = @transform_3, window_bounds = array<i64: 128, 128>}, {pipeline_mode = #tpu.pipeline_mode<synchronous>, transform_indices = @transform_4, window_bounds = array<i64: 1, 128>}, {pipeline_mode = #tpu.pipeline_mode<synchronous>, transform_indices = @transform_5, window_bounds = array<i64: 128, 128>}, {pipeline_mode = #tpu.pipeline_mode<synchronous>, transform_indices = @transform_6, window_bounds = array<i64: 1, 128>}, {pipeline_mode = #tpu.pipeline_mode<synchronous>, transform_indices = @transform_7, window_bounds = array<i64: 128, 128>}, {pipeline_mode = #tpu.pipeline_mode<synchronous>, transform_indices = @transform_8, window_bounds = array<i64: 1, 128>}, {transform_indices = @transform_9, window_bounds = array<i64: 8, 128>}]} {
    %c0 = arith.constant 0 : index
    %c0_0 = arith.constant 0 : index
    %0 = vector.load %arg1[%c0, %c0_0] : memref<8x128xf32, #tpu.memory_space<vmem>>, vector<8x128xf32>
    %c0_1 = arith.constant 0 : index
    %c0_2 = arith.constant 0 : index
    %1 = vector.load %arg2[%c0_1, %c0_2] : memref<128x128xf32, #tpu.memory_space<vmem>>, vector<128x128xf32>
    %c0_3 = arith.constant 0 : index
    %c0_4 = arith.constant 0 : index
    %2 = vector.load %arg3[%c0_3, %c0_4] : memref<1x128xf32, #tpu.memory_space<vmem>>, vector<1x128xf32>
    %cst = arith.constant dense<0.000000e+00> : vector<8x128xf32>
    %3 = tpu.matmul %0, %1, %cst {dimension_numbers = #tpu.dot_dimension_numbers<[1], [0], [0], [1], [0, 0, 1, 1], [], []>} : vector<8x128xf32>, vector<128x128xf32>, vector<8x128xf32> -> vector<8x128xf32>
    %4 = vector.broadcast %2 : vector<1x128xf32> to vector<8x128xf32>
    %5 = arith.addf %3, %4 : vector<8x128xf32>
    %cst_5 = arith.constant 0.000000e+00 : f32
    %6 = vector.broadcast %cst_5 : f32 to vector<8x128xf32>
    %7 = arith.maximumf %5, %6 : vector<8x128xf32>
    %c0_6 = arith.constant 0 : index
    %c0_7 = arith.constant 0 : index
    %8 = vector.load %arg4[%c0_6, %c0_7] : memref<128x128xf32, #tpu.memory_space<vmem>>, vector<128x128xf32>
    %c0_8 = arith.constant 0 : index
    %c0_9 = arith.constant 0 : index
    %9 = vector.load %arg5[%c0_8, %c0_9] : memref<1x128xf32, #tpu.memory_space<vmem>>, vector<1x128xf32>
    %cst_10 = arith.constant dense<0.000000e+00> : vector<8x128xf32>
    %10 = tpu.matmul %7, %8, %cst_10 {dimension_numbers = #tpu.dot_dimension_numbers<[1], [0], [0], [1], [0, 0, 1, 1], [], []>} : vector<8x128xf32>, vector<128x128xf32>, vector<8x128xf32> -> vector<8x128xf32>
    %11 = vector.broadcast %9 : vector<1x128xf32> to vector<8x128xf32>
    %12 = arith.addf %10, %11 : vector<8x128xf32>
    %cst_11 = arith.constant 0.000000e+00 : f32
    %13 = vector.broadcast %cst_11 : f32 to vector<8x128xf32>
    %14 = arith.maximumf %12, %13 : vector<8x128xf32>
    %c0_12 = arith.constant 0 : index
    %c0_13 = arith.constant 0 : index
    %15 = vector.load %arg6[%c0_12, %c0_13] : memref<128x128xf32, #tpu.memory_space<vmem>>, vector<128x128xf32>
    %c0_14 = arith.constant 0 : index
    %c0_15 = arith.constant 0 : index
    %16 = vector.load %arg7[%c0_14, %c0_15] : memref<1x128xf32, #tpu.memory_space<vmem>>, vector<1x128xf32>
    %cst_16 = arith.constant dense<0.000000e+00> : vector<8x128xf32>
    %17 = tpu.matmul %14, %15, %cst_16 {dimension_numbers = #tpu.dot_dimension_numbers<[1], [0], [0], [1], [0, 0, 1, 1], [], []>} : vector<8x128xf32>, vector<128x128xf32>, vector<8x128xf32> -> vector<8x128xf32>
    %18 = vector.broadcast %16 : vector<1x128xf32> to vector<8x128xf32>
    %19 = arith.addf %17, %18 : vector<8x128xf32>
    %cst_17 = arith.constant 0.000000e+00 : f32
    %20 = vector.broadcast %cst_17 : f32 to vector<8x128xf32>
    %21 = arith.maximumf %19, %20 : vector<8x128xf32>
    %c0_18 = arith.constant 0 : index
    %c0_19 = arith.constant 0 : index
    %22 = vector.load %arg8[%c0_18, %c0_19] : memref<128x128xf32, #tpu.memory_space<vmem>>, vector<128x128xf32>
    %c0_20 = arith.constant 0 : index
    %c0_21 = arith.constant 0 : index
    %23 = vector.load %arg9[%c0_20, %c0_21] : memref<1x128xf32, #tpu.memory_space<vmem>>, vector<1x128xf32>
    %cst_22 = arith.constant dense<0.000000e+00> : vector<8x128xf32>
    %24 = tpu.matmul %21, %22, %cst_22 {dimension_numbers = #tpu.dot_dimension_numbers<[1], [0], [0], [1], [0, 0, 1, 1], [], []>} : vector<8x128xf32>, vector<128x128xf32>, vector<8x128xf32> -> vector<8x128xf32>
    %25 = vector.broadcast %23 : vector<1x128xf32> to vector<8x128xf32>
    %26 = arith.addf %24, %25 : vector<8x128xf32>
    %c0_23 = arith.constant 0 : index
    %c0_24 = arith.constant 0 : index
    %27 = vector.load %arg10[%c0_23, %c0_24] : memref<8x128xf32, #tpu.memory_space<vmem>>, vector<8x128xf32>
    tpu.vector_store %arg10[%c0_23, %c0_24], %26 {strides = array<i32>} : memref<8x128xf32, #tpu.memory_space<vmem>>, vector<8x128xf32>,
    return
  }
  func.func @transform_0(%arg0: i32) -> (i32, i32) {
    %c0_i32 = arith.constant 0 : i32
    %c0_i32_0 = arith.constant 0 : i32
    return %arg0, %c0_i32 : i32, i32
  }
  func.func @transform_1(%arg0: i32) -> (i32, i32) {
    %c0_i32 = arith.constant 0 : i32
    %c0_i32_0 = arith.constant 0 : i32
    %c0_i32_1 = arith.constant 0 : i32
    return %c0_i32, %c0_i32_0 : i32, i32
  }
  func.func @transform_2(%arg0: i32) -> (i32, i32) {
    %c0_i32 = arith.constant 0 : i32
    %c0_i32_0 = arith.constant 0 : i32
    %c0_i32_1 = arith.constant 0 : i32
    return %c0_i32, %c0_i32_0 : i32, i32
  }
  func.func @transform_3(%arg0: i32) -> (i32, i32) {
    %c0_i32 = arith.constant 0 : i32
    %c0_i32_0 = arith.constant 0 : i32
    %c0_i32_1 = arith.constant 0 : i32
    return %c0_i32, %c0_i32_0 : i32, i32
  }
  func.func @transform_4(%arg0: i32) -> (i32, i32) {
    %c0_i32 = arith.constant 0 : i32
    %c0_i32_0 = arith.constant 0 : i32
    %c0_i32_1 = arith.constant 0 : i32
    return %c0_i32, %c0_i32_0 : i32, i32
  }
  func.func @transform_5(%arg0: i32) -> (i32, i32) {
    %c0_i32 = arith.constant 0 : i32
    %c0_i32_0 = arith.constant 0 : i32
    %c0_i32_1 = arith.constant 0 : i32
    return %c0_i32, %c0_i32_0 : i32, i32
  }
  func.func @transform_6(%arg0: i32) -> (i32, i32) {
    %c0_i32 = arith.constant 0 : i32
    %c0_i32_0 = arith.constant 0 : i32
    %c0_i32_1 = arith.constant 0 : i32
    return %c0_i32, %c0_i32_0 : i32, i32
  }
  func.func @transform_7(%arg0: i32) -> (i32, i32) {
    %c0_i32 = arith.constant 0 : i32
    %c0_i32_0 = arith.constant 0 : i32
    %c0_i32_1 = arith.constant 0 : i32
    return %c0_i32, %c0_i32_0 : i32, i32
  }
  func.func @transform_8(%arg0: i32) -> (i32, i32) {
    %c0_i32 = arith.constant 0 : i32
    %c0_i32_0 = arith.constant 0 : i32
    %c0_i32_1 = arith.constant 0 : i32
    return %c0_i32, %c0_i32_0 : i32, i32
  }
  func.func @transform_9(%arg0: i32) -> (i32, i32) {
    %c0_i32 = arith.constant 0 : i32
    %c0_i32_0 = arith.constant 0 : i32
    return %arg0, %c0_i32 : i32, i32
  }
}

module attributes {stable_mosaic.version = 11 : i64} {
  func.func @mlp_kernel(%arg0: i32, %arg1: memref<8x128xf32, #tpu.memory_space<vmem>>, %arg2: memref<128x128xf32, #tpu.memory_space<vmem>>, %arg3: memref<1x128xf32, #tpu.memory_space<vmem>>, %arg4: memref<128x128xf32, #tpu.memory_space<vmem>>, %arg5: memref<1x128xf32, #tpu.memory_space<vmem>>, %arg6: memref<128x128xf32, #tpu.memory_space<vmem>>, %arg7: memref<1x128xf32, #tpu.memory_space<vmem>>, %arg8: memref<128x128xf32, #tpu.memory_space<vmem>>, %arg9: memref<1x128xf32, #tpu.memory_space<vmem>>, %arg10: memref<8x128xf32, #tpu.memory_space<vmem>>) attributes {dimension_semantics = [#tpu.dimension_semantics<parallel>], iteration_bounds = array<i64: 1>, scalar_prefetch = 0 : i64, scratch_operands = 0 : i64, tpu.core_type = #tpu.core_type<tc>, window_params = [{transform_indices = @transform_0, window_bounds = array<i64: 8, 128>}, {pipeline_mode = #tpu.pipeline_mode<synchronous>, transform_indices = @transform_1, window_bounds = array<i64: 128, 128>}, {pipeline_mode = #tpu.pipeline_mode<synchronous>, transform_indices = @transform_2, window_bounds = array<i64: 1, 128>}, {pipeline_mode = #tpu.pipeline_mode<synchronous>, transform_indices = @transform_3, window_bounds = array<i64: 128, 128>}, {pipeline_mode = #tpu.pipeline_mode<synchronous>, transform_indices = @transform_4, window_bounds = array<i64: 1, 128>}, {pipeline_mode = #tpu.pipeline_mode<synchronous>, transform_indices = @transform_5, window_bounds = array<i64: 128, 128>}, {pipeline_mode = #tpu.pipeline_mode<synchronous>, transform_indices = @transform_6, window_bounds = array<i64: 1, 128>}, {pipeline_mode = #tpu.pipeline_mode<synchronous>, transform_indices = @transform_7, window_bounds = array<i64: 128, 128>}, {pipeline_mode = #tpu.pipeline_mode<synchronous>, transform_indices = @transform_8, window_bounds = array<i64: 1, 128>}, {transform_indices = @transform_9, window_bounds = array<i64: 8, 128>}]} {
    %c0 = arith.constant 0 : index
    %c0_0 = arith.constant 0 : index
    %0 = vector.load %arg1[%c0, %c0_0] : memref<8x128xf32, #tpu.memory_space<vmem>>, vector<8x128xf32>
    %c0_1 = arith.constant 0 : index
    %c0_2 = arith.constant 0 : index
    %1 = vector.load %arg2[%c0_1, %c0_2] : memref<128x128xf32, #tpu.memory_space<vmem>>, vector<128x128xf32>
    %c0_3 = arith.constant 0 : index
    %c0_4 = arith.constant 0 : index
    %2 = vector.load %arg3[%c0_3, %c0_4] : memref<1x128xf32, #tpu.memory_space<vmem>>, vector<1x128xf32>
    %cst = arith.constant dense<0.000000e+00> : vector<8x128xf32>
    %3 = tpu.matmul %0, %1, %cst {dimension_numbers = #tpu.dot_dimension_numbers<[1], [0], [0], [1], [0, 0, 1, 1], [], []>} : vector<8x128xf32>, vector<128x128xf32>, vector<8x128xf32> -> vector<8x128xf32>
    %4 = vector.broadcast %2 : vector<1x128xf32> to vector<8x128xf32>
    %5 = arith.addf %3, %4 : vector<8x128xf32>
    %cst_5 = arith.constant 0.000000e+00 : f32
    %6 = vector.broadcast %cst_5 : f32 to vector<8x128xf32>
    %7 = arith.maximumf %5, %6 : vector<8x128xf32>
    %c0_6 = arith.constant 0 : index
    %c0_7 = arith.constant 0 : index
    %8 = vector.load %arg4[%c0_6, %c0_7] : memref<128x128xf32, #tpu.memory_space<vmem>>, vector<128x128xf32>
    %c0_8 = arith.constant 0 : index
    %c0_9 = arith.constant 0 : index
    %9 = vector.load %arg5[%c0_8, %c0_9] : memref<1x128xf32, #tpu.memory_space<vmem>>, vector<1x128xf32>
    %cst_10 = arith.constant dense<0.000000e+00> : vector<8x128xf32>
    %10 = tpu.matmul %7, %8, %cst_10 {dimension_numbers = #tpu.dot_dimension_numbers<[1], [0], [0], [1], [0, 0, 1, 1], [], []>} : vector<8x128xf32>, vector<128x128xf32>, vector<8x128xf32> -> vector<8x128xf32>
    %11 = vector.broadcast %9 : vector<1x128xf32> to vector<8x128xf32>
    %12 = arith.addf %10, %11 : vector<8x128xf32>
    %cst_11 = arith.constant 0.000000e+00 : f32
    %13 = vector.broadcast %cst_11 : f32 to vector<8x128xf32>
    %14 = arith.maximumf %12, %13 : vector<8x128xf32>
    %c0_12 = arith.constant 0 : index
    %c0_13 = arith.constant 0 : index
    %15 = vector.load %arg6[%c0_12, %c0_13] : memref<128x128xf32, #tpu.memory_space<vmem>>, vector<128x128xf32>
    %c0_14 = arith.constant 0 : index
    %c0_15 = arith.constant 0 : index
    %16 = vector.load %arg7[%c0_14, %c0_15] : memref<1x128xf32, #tpu.memory_space<vmem>>, vector<1x128xf32>
    %cst_16 = arith.constant dense<0.000000e+00> : vector<8x128xf32>
    %17 = tpu.matmul %14, %15, %cst_16 {dimension_numbers = #tpu.dot_dimension_numbers<[1], [0], [0], [1], [0, 0, 1, 1], [], []>} : vector<8x128xf32>, vector<128x128xf32>, vector<8x128xf32> -> vector<8x128xf32>
    %18 = vector.broadcast %16 : vector<1x128xf32> to vector<8x128xf32>
    %19 = arith.addf %17, %18 : vector<8x128xf32>
    %cst_17 = arith.constant 0.000000e+00 : f32
    %20 = vector.broadcast %cst_17 : f32 to vector<8x128xf32>
    %21 = arith.maximumf %19, %20 : vector<8x128xf32>
    %c0_18 = arith.constant 0 : index
    %c0_19 = arith.constant 0 : index
    %22 = vector.load %arg8[%c0_18, %c0_19] : memref<128x128xf32, #tpu.memory_space<vmem>>, vector<128x128xf32>
    %c0_20 = arith.constant 0 : index
    %c0_21 = arith.constant 0 : index
    %23 = vector.load %arg9[%c0_20, %c0_21] : memref<1x128xf32, #tpu.memory_space<vmem>>, vector<1x128xf32>
    %cst_22 = arith.constant dense<0.000000e+00> : vector<8x128xf32>
    %24 = tpu.matmul %21, %22, %cst_22 {dimension_numbers = #tpu.dot_dimension_numbers<[1], [0], [0], [1], [0, 0, 1, 1], [], []>} : vector<8x128xf32>, vector<128x128xf32>, vector<8x128xf32> -> vector<8x128xf32>
    %25 = vector.broadcast %23 : vector<1x128xf32> to vector<8x128xf32>
    %26 = arith.addf %24, %25 : vector<8x128xf32>
    %c0_23 = arith.constant 0 : index
    %c0_24 = arith.constant 0 : index
    %27 = vector.load %arg10[%c0_23, %c0_24] : memref<8x128xf32, #tpu.memory_space<vmem>>, vector<8x128xf32>
    tpu.vector_store %arg10[%c0_23, %c0_24], %26 {strides = array<i32>} : memref<8x128xf32, #tpu.memory_space<vmem>>, vector<8x128xf32>,
    return
  }
  func.func @transform_0(%arg0: i32) -> (i32, i32) {
    %c0_i32 = arith.constant 0 : i32
    %c0_i32_0 = arith.constant 0 : i32
    return %arg0, %c0_i32 : i32, i32
  }
  func.func @transform_1(%arg0: i32) -> (i32, i32) {
    %c0_i32 = arith.constant 0 : i32
    %c0_i32_0 = arith.constant 0 : i32
    %c0_i32_1 = arith.constant 0 : i32
    return %c0_i32, %c0_i32_0 : i32, i32
  }
  func.func @transform_2(%arg0: i32) -> (i32, i32) {
    %c0_i32 = arith.constant 0 : i32
    %c0_i32_0 = arith.constant 0 : i32
    %c0_i32_1 = arith.constant 0 : i32
    return %c0_i32, %c0_i32_0 : i32, i32
  }
  func.func @transform_3(%arg0: i32) -> (i32, i32) {
    %c0_i32 = arith.constant 0 : i32
    %c0_i32_0 = arith.constant 0 : i32
    %c0_i32_1 = arith.constant 0 : i32
    return %c0_i32, %c0_i32_0 : i32, i32
  }
  func.func @transform_4(%arg0: i32) -> (i32, i32) {
    %c0_i32 = arith.constant 0 : i32
    %c0_i32_0 = arith.constant 0 : i32
    %c0_i32_1 = arith.constant 0 : i32
    return %c0_i32, %c0_i32_0 : i32, i32
  }
  func.func @transform_5(%arg0: i32) -> (i32, i32) {
    %c0_i32 = arith.constant 0 : i32
    %c0_i32_0 = arith.constant 0 : i32
    %c0_i32_1 = arith.constant 0 : i32
    return %c0_i32, %c0_i32_0 : i32, i32
  }
  func.func @transform_6(%arg0: i32) -> (i32, i32) {
    %c0_i32 = arith.constant 0 : i32
    %c0_i32_0 = arith.constant 0 : i32
    %c0_i32_1 = arith.constant 0 : i32
    return %c0_i32, %c0_i32_0 : i32, i32
  }
  func.func @transform_7(%arg0: i32) -> (i32, i32) {
    %c0_i32 = arith.constant 0 : i32
    %c0_i32_0 = arith.constant 0 : i32
    %c0_i32_1 = arith.constant 0 : i32
    return %c0_i32, %c0_i32_0 : i32, i32
  }
  func.func @transform_8(%arg0: i32) -> (i32, i32) {
    %c0_i32 = arith.constant 0 : i32
    %c0_i32_0 = arith.constant 0 : i32
    %c0_i32_1 = arith.constant 0 : i32
    return %c0_i32, %c0_i32_0 : i32, i32
  }
  func.func @transform_9(%arg0: i32) -> (i32, i32) {
    %c0_i32 = arith.constant 0 : i32
    %c0_i32_0 = arith.constant 0 : i32
    return %arg0, %c0_i32 : i32, i32
  }
}

</mosaic_0001>

<llo_original>
// kernel: tpu_custom_call.1
$region0: #{tpu_custom_call.1}
  #allocation0 [shape = 'u32[]', space=smem, size = 0x4, offset = 0x4, fixed_abs, tag = 'smem constant byte address 0x4 - core index']
  #allocation1 [shape = 'u32[72,128]{1,0:T(1,128)}', space=vmem, size = 0x9000, scoped, tag = 'internal scratch']
  %s0 = inlined_call_operand.hbm [shape: f32[8,128], index: 0, kind: input, shape index: {}]
  %s1 = inlined_call_operand.hbm [shape: f32[128,128], index: 1, kind: input, shape index: {}]
  %s2 = inlined_call_operand.vmem [shape: f32[1,128], index: 2, kind: input, shape index: {}]
  %s3 = inlined_call_operand.hbm [shape: f32[128,128], index: 3, kind: input, shape index: {}]
  %s4 = inlined_call_operand.vmem [shape: f32[1,128], index: 4, kind: input, shape index: {}]
  %s5 = inlined_call_operand.hbm [shape: f32[128,128], index: 5, kind: input, shape index: {}]
  %s6 = inlined_call_operand.vmem [shape: f32[1,128], index: 6, kind: input, shape index: {}]
  %s7 = inlined_call_operand.hbm [shape: f32[128,128], index: 7, kind: input, shape index: {}]
  %s8 = inlined_call_operand.vmem [shape: f32[1,128], index: 8, kind: input, shape index: {}]
  %s9 = inlined_call_operand.hbm [shape: f32[8,128], index: 9, kind: output, shape index: {}]
  %s10 = sld [smem:[#allocation0]]
  $region66: #{tpu_custom_call.1} parent=0
    _
  %s12 = ssub.s32 1, %s10
  %s13 = scalar_select 0, %s12, %s10
  $region1: #{tpu_custom_call.1} parent=0
    #allocation2 [shape = 'u8[4096]{0}', space=vmem, size = 0x1000, scoped, tag = 'input window, operand 0, single buffered']
    #allocation3 [shape = 's32[1]{0}', space=sflag, size = 0x4, scoped, tag = 'scoped memory for tpu_custom_call.1']
    #allocation4 [shape = 's32[1]{0}', space=sflag, size = 0x4, scoped, tag = 'scoped memory for tpu_custom_call.1']
    #allocation5 [shape = 'u8[65536]{0}', space=vmem, size = 0x10000, scoped, tag = 'input window, operand 1, single buffered']
    #allocation6 [shape = 's32[1]{0}', space=sflag, size = 0x4, scoped, tag = 'scoped memory for tpu_custom_call.1']
    #allocation7 [shape = 'u8[65536]{0}', space=vmem, size = 0x10000, scoped, tag = 'input window, operand 3, single buffered']
    #allocation8 [shape = 'u8[65536]{0}', space=vmem, size = 0x10000, scoped, tag = 'input window, operand 5, single buffered']
    #allocation9 [shape = 's32[1]{0}', space=sflag, size = 0x4, scoped, tag = 'scoped memory for tpu_custom_call.1']
    #allocation10 [shape = 'u8[65536]{0}', space=vmem, size = 0x10000, scoped, tag = 'input window, operand 7, single buffered']
    #allocation11 [shape = 'u8[4096]{0}', space=vmem, size = 0x1000, scoped, tag = 'output window, operand 0, single buffered']
    %14 = vsyncpa [#allocation3], 0
    %15 = vsyncpa [#allocation6], 0
    %16 = vsyncpa [#allocation9], 0
    %17 = vsyncpa [#allocation4], 0
    // Predicated region
    $region2: #{tpu_custom_call.1} parent=1 // pred_check
      _
    $region3: #{tpu_custom_call.1} parent=1 // pred_check_branch
      %19 = sbr.rel (0) target = $region5
    $region4: #{tpu_custom_call.1} parent=1 // pred_region
      %21 = vsyncadd [#allocation3], 0
      %s23 = sshll.u32 %s0, 4
      %s24 = int_to_ptr.hbm [resolvable:$true] %s23
      %s25 = sshll.u32 [#allocation2], 4
      %s26 = int_to_ptr.vmem [resolvable:$true] %s25
      %28 = dma.hbm_to_vmem [thread:$0]  %s24, 128, %s26, [#allocation3]
    $region5: #{tpu_custom_call.1} parent=1 // pred_fallthru
      _
    // Predicated region
    $region6: #{tpu_custom_call.1} parent=1 // pred_check
      _
    $region7: #{tpu_custom_call.1} parent=1 // pred_check_branch
      %30 = sbr.rel (0) target = $region9
    $region8: #{tpu_custom_call.1} parent=1 // pred_region
      %32 = vsyncadd [#allocation6], 0
      %s33 = sshll.u32 %s1, 4
      %s34 = int_to_ptr.hbm [resolvable:$true] %s33
      %s35 = sshll.u32 [#allocation5], 4
      %s36 = int_to_ptr.vmem [resolvable:$true] %s35
      %41 = dma.hbm_to_vmem [thread:$0]  %s34, 2048, %s36, [#allocation6], 128, 128, 8
    $region9: #{tpu_custom_call.1} parent=1 // pred_fallthru
      _
    // Predicated region
    $region10: #{tpu_custom_call.1} parent=1 // pred_check
      _
    $region11: #{tpu_custom_call.1} parent=1 // pred_check_branch
      %43 = sbr.rel (0) target = $region13
    $region12: #{tpu_custom_call.1} parent=1 // pred_region
      _
    $region13: #{tpu_custom_call.1} parent=1 // pred_fallthru
      _
    // Predicated region
    $region14: #{tpu_custom_call.1} parent=1 // pred_check
      _
    $region15: #{tpu_custom_call.1} parent=1 // pred_check_branch
      %45 = sbr.rel (0) target = $region17
    $region16: #{tpu_custom_call.1} parent=1 // pred_region
      %47 = vsyncadd [#allocation6], 0
      %s48 = sshll.u32 %s3, 4
      %s49 = int_to_ptr.hbm [resolvable:$true] %s48
      %s50 = sshll.u32 [#allocation7], 4
      %s51 = int_to_ptr.vmem [resolvable:$true] %s50
      %56 = dma.hbm_to_vmem [thread:$0]  %s49, 2048, %s51, [#allocation6], 128, 128, 8
    $region17: #{tpu_custom_call.1} parent=1 // pred_fallthru
      _
    // Predicated region
    $region18: #{tpu_custom_call.1} parent=1 // pred_check
      _
    $region19: #{tpu_custom_call.1} parent=1 // pred_check_branch
      %58 = sbr.rel (0) target = $region21
    $region20: #{tpu_custom_call.1} parent=1 // pred_region
      _
    $region21: #{tpu_custom_call.1} parent=1 // pred_fallthru
      _
    // Predicated region
    $region22: #{tpu_custom_call.1} parent=1 // pred_check
      _
    $region23: #{tpu_custom_call.1} parent=1 // pred_check_branch
      %60 = sbr.rel (0) target = $region25
    $region24: #{tpu_custom_call.1} parent=1 // pred_region
      %62 = vsyncadd [#allocation9], 0
      %s63 = sshll.u32 %s5, 4
      %s64 = int_to_ptr.hbm [resolvable:$true] %s63
      %s65 = sshll.u32 [#allocation8], 4
      %s66 = int_to_ptr.vmem [resolvable:$true] %s65
      %71 = dma.hbm_to_vmem [thread:$0]  %s64, 2048, %s66, [#allocation9], 128, 128, 8
    $region25: #{tpu_custom_call.1} parent=1 // pred_fallthru
      _
    // Predicated region
    $region26: #{tpu_custom_call.1} parent=1 // pred_check
      _
    $region27: #{tpu_custom_call.1} parent=1 // pred_check_branch
      %73 = sbr.rel (0) target = $region29
    $region28: #{tpu_custom_call.1} parent=1 // pred_region
      _
    $region29: #{tpu_custom_call.1} parent=1 // pred_fallthru
      _
    // Predicated region
    $region30: #{tpu_custom_call.1} parent=1 // pred_check
      _
    $region31: #{tpu_custom_call.1} parent=1 // pred_check_branch
      %75 = sbr.rel (0) target = $region33
    $region32: #{tpu_custom_call.1} parent=1 // pred_region
      %77 = vsyncadd [#allocation9], 0
      %s78 = sshll.u32 %s7, 4
      %s79 = int_to_ptr.hbm [resolvable:$true] %s78
      %s80 = sshll.u32 [#allocation10], 4
      %s81 = int_to_ptr.vmem [resolvable:$true] %s80
      %86 = dma.hbm_to_vmem [thread:$0]  %s79, 2048, %s81, [#allocation9], 128, 128, 8
    $region33: #{tpu_custom_call.1} parent=1 // pred_fallthru
      _
    // Predicated region
    $region34: #{tpu_custom_call.1} parent=1 // pred_check
      _
    $region35: #{tpu_custom_call.1} parent=1 // pred_check_branch
      %88 = sbr.rel (0) target = $region37
    $region36: #{tpu_custom_call.1} parent=1 // pred_region
      _
    $region37: #{tpu_custom_call.1} parent=1 // pred_fallthru
      _
    // Predicated region
    $region38: #{tpu_custom_call.1} parent=1 // pred_check
      _
    $region39: #{tpu_custom_call.1} parent=1 // pred_check_branch
      %90 = sbr.rel (0) target = $region41
    $region40: #{tpu_custom_call.1} parent=1 // pred_region
      %92 = dma.done [#allocation3], 128
    $region41: #{tpu_custom_call.1} parent=1 // pred_fallthru
      _
    // Predicated region
    $region42: #{tpu_custom_call.1} parent=1 // pred_check
      _
    $region43: #{tpu_custom_call.1} parent=1 // pred_check_branch
      %94 = sbr.rel (0) target = $region45
    $region44: #{tpu_custom_call.1} parent=1 // pred_region
      %96 = dma.done [#allocation6], 2048
    $region45: #{tpu_custom_call.1} parent=1 // pred_fallthru
      _
    // Predicated region
    $region46: #{tpu_custom_call.1} parent=1 // pred_check
      _
    $region47: #{tpu_custom_call.1} parent=1 // pred_check_branch
      %98 = sbr.rel (0) target = $region49
    $region48: #{tpu_custom_call.1} parent=1 // pred_region
      %100 = dma.done [#allocation6], 2048
    $region49: #{tpu_custom_call.1} parent=1 // pred_fallthru
      _
    // Predicated region
    $region50: #{tpu_custom_call.1} parent=1 // pred_check
      _
    $region51: #{tpu_custom_call.1} parent=1 // pred_check_branch
      %102 = sbr.rel (0) target = $region53
    $region52: #{tpu_custom_call.1} parent=1 // pred_region
      %104 = dma.done [#allocation9], 2048
    $region53: #{tpu_custom_call.1} parent=1 // pred_fallthru
      _
    // Predicated region
    $region54: #{tpu_custom_call.1} parent=1 // pred_check
      _
    $region55: #{tpu_custom_call.1} parent=1 // pred_check_branch
      %106 = sbr.rel (0) target = $region57
    $region56: #{tpu_custom_call.1} parent=1 // pred_region
      %108 = dma.done [#allocation9], 2048
    $region57: #{tpu_custom_call.1} parent=1 // pred_fallthru
      _
    %v109 = vld [vmem:[#allocation2] sm:$0xff]
    %v110 = vld [vmem:[#allocation5] sm:$0xff]
    %v111 = vld [vmem:[#allocation5 + $0x8] sm:$0xff]
    %v112 = vld [vmem:[#allocation5 + $0x10] sm:$0xff]
    %v113 = vld [vmem:[#allocation5 + $0x18] sm:$0xff]
    %v114 = vld [vmem:[#allocation5 + $0x20] sm:$0xff]
    %v115 = vld [vmem:[#allocation5 + $0x28] sm:$0xff]
    %v116 = vld [vmem:[#allocation5 + $0x30] sm:$0xff]
    %v117 = vld [vmem:[#allocation5 + $0x38] sm:$0xff]
    %v118 = vld [vmem:[#allocation5 + $0x40] sm:$0xff]
    %v119 = vld [vmem:[#allocation5 + $0x48] sm:$0xff]
    %v120 = vld [vmem:[#allocation5 + $0x50] sm:$0xff]
    %v121 = vld [vmem:[#allocation5 + $0x58] sm:$0xff]
    %v122 = vld [vmem:[#allocation5 + $0x60] sm:$0xff]
    %v123 = vld [vmem:[#allocation5 + $0x68] sm:$0xff]
    %v124 = vld [vmem:[#allocation5 + $0x70] sm:$0xff]
    %v125 = vld [vmem:[#allocation5 + $0x78] sm:$0xff]
    %v126 = vld [vmem:[%s2] sm:$0x1]
    %v128 = vperm.slane %v126, 0
    %130 = vmatpush.msra.mxu0 %v125
    %131 = vmatpush.msra.mxu0 %v124
    %132 = vmatpush.msra.mxu0 %v123
    %133 = vmatpush.msra.mxu0 %v122
    %134 = vmatpush.msra.mxu0 %v121
    %135 = vmatpush.msra.mxu0 %v120
    %136 = vmatpush.msra.mxu0 %v119
    %137 = vmatpush.msra.mxu0 %v118
    %138 = vmatpush.msra.mxu0 %v117
    %139 = vmatpush.msra.mxu0 %v116
    %140 = vmatpush.msra.mxu0 %v115
    %141 = vmatpush.msra.mxu0 %v114
    %142 = vmatpush.msra.mxu0 %v113
    %143 = vmatpush.msra.mxu0 %v112
    %144 = vmatpush.msra.mxu0 %v111
    %145 = vmatpush.msra.mxu0 %v110
    %146 = vmatmul.f32.gmra.mxu0 %v109
    %v147 = vpop.f32.mrf.mxu0
    %v148 = vadd.f32 %v128, %v147
    %149 = vdwg.mxu0
    %v150 = vmax.f32 %v148, 0.0
    %v151 = vld [vmem:[#allocation7] sm:$0xff]
    %v152 = vld [vmem:[#allocation7 + $0x8] sm:$0xff]
    %v153 = vld [vmem:[#allocation7 + $0x10] sm:$0xff]
    %v154 = vld [vmem:[#allocation7 + $0x18] sm:$0xff]
    %v155 = vld [vmem:[#allocation7 + $0x20] sm:$0xff]
    %v156 = vld [vmem:[#allocation7 + $0x28] sm:$0xff]
    %v157 = vld [vmem:[#allocation7 + $0x30] sm:$0xff]
    %v158 = vld [vmem:[#allocation7 + $0x38] sm:$0xff]
    %v159 = vld [vmem:[#allocation7 + $0x40] sm:$0xff]
    %v160 = vld [vmem:[#allocation7 + $0x48] sm:$0xff]
    %v161 = vld [vmem:[#allocation7 + $0x50] sm:$0xff]
    %v162 = vld [vmem:[#allocation7 + $0x58] sm:$0xff]
    %v163 = vld [vmem:[#allocation7 + $0x60] sm:$0xff]
    %v164 = vld [vmem:[#allocation7 + $0x68] sm:$0xff]
    %v165 = vld [vmem:[#allocation7 + $0x70] sm:$0xff]
    %v166 = vld [vmem:[#allocation7 + $0x78] sm:$0xff]
    %v167 = vld [vmem:[%s4] sm:$0x1]
    %v169 = vperm.slane %v167, 0
    %171 = vmatpush.msra.mxu0 %v166
    %172 = vmatpush.msra.mxu0 %v165
    %173 = vmatpush.msra.mxu0 %v164
    %174 = vmatpush.msra.mxu0 %v163
    %175 = vmatpush.msra.mxu0 %v162
    %176 = vmatpush.msra.mxu0 %v161
    %177 = vmatpush.msra.mxu0 %v160
    %178 = vmatpush.msra.mxu0 %v159
    %179 = vmatpush.msra.mxu0 %v158
    %180 = vmatpush.msra.mxu0 %v157
    %181 = vmatpush.msra.mxu0 %v156
    %182 = vmatpush.msra.mxu0 %v155
    %183 = vmatpush.msra.mxu0 %v154
    %184 = vmatpush.msra.mxu0 %v153
    %185 = vmatpush.msra.mxu0 %v152
    %186 = vmatpush.msra.mxu0 %v151
    %187 = vmatmul.f32.gmra.mxu0 %v150
    %v188 = vpop.f32.mrf.mxu0
    %v189 = vadd.f32 %v169, %v188
    %190 = vdwg.mxu0
    %v191 = vmax.f32 %v189, 0.0
    %v192 = vld [vmem:[#allocation8] sm:$0xff]
    %v193 = vld [vmem:[#allocation8 + $0x8] sm:$0xff]
    %v194 = vld [vmem:[#allocation8 + $0x10] sm:$0xff]
    %v195 = vld [vmem:[#allocation8 + $0x18] sm:$0xff]
    %v196 = vld [vmem:[#allocation8 + $0x20] sm:$0xff]
    %v197 = vld [vmem:[#allocation8 + $0x28] sm:$0xff]
    %v198 = vld [vmem:[#allocation8 + $0x30] sm:$0xff]
    %v199 = vld [vmem:[#allocation8 + $0x38] sm:$0xff]
    %v200 = vld [vmem:[#allocation8 + $0x40] sm:$0xff]
    %v201 = vld [vmem:[#allocation8 + $0x48] sm:$0xff]
    %v202 = vld [vmem:[#allocation8 + $0x50] sm:$0xff]
    %v203 = vld [vmem:[#allocation8 + $0x58] sm:$0xff]
    %v204 = vld [vmem:[#allocation8 + $0x60] sm:$0xff]
    %v205 = vld [vmem:[#allocation8 + $0x68] sm:$0xff]
    %v206 = vld [vmem:[#allocation8 + $0x70] sm:$0xff]
    %v207 = vld [vmem:[#allocation8 + $0x78] sm:$0xff]
    %v208 = vld [vmem:[%s6] sm:$0x1]
    %v210 = vperm.slane %v208, 0
    %212 = vmatpush.msra.mxu0 %v207
    %213 = vmatpush.msra.mxu0 %v206
    %214 = vmatpush.msra.mxu0 %v205
    %215 = vmatpush.msra.mxu0 %v204
    %216 = vmatpush.msra.mxu0 %v203
    %217 = vmatpush.msra.mxu0 %v202
    %218 = vmatpush.msra.mxu0 %v201
    %219 = vmatpush.msra.mxu0 %v200
    %220 = vmatpush.msra.mxu0 %v199
    %221 = vmatpush.msra.mxu0 %v198
    %222 = vmatpush.msra.mxu0 %v197
    %223 = vmatpush.msra.mxu0 %v196
    %224 = vmatpush.msra.mxu0 %v195
    %225 = vmatpush.msra.mxu0 %v194
    %226 = vmatpush.msra.mxu0 %v193
    %227 = vmatpush.msra.mxu0 %v192
    %228 = vmatmul.f32.gmra.mxu0 %v191
    %v229 = vpop.f32.mrf.mxu0
    %v230 = vadd.f32 %v210, %v229
    %231 = vdwg.mxu0
    %v232 = vmax.f32 %v230, 0.0
    %v233 = vld [vmem:[#allocation10] sm:$0xff]
    %v234 = vld [vmem:[#allocation10 + $0x8] sm:$0xff]
    %v235 = vld [vmem:[#allocation10 + $0x10] sm:$0xff]
    %v236 = vld [vmem:[#allocation10 + $0x18] sm:$0xff]
    %v237 = vld [vmem:[#allocation10 + $0x20] sm:$0xff]
    %v238 = vld [vmem:[#allocation10 + $0x28] sm:$0xff]
    %v239 = vld [vmem:[#allocation10 + $0x30] sm:$0xff]
    %v240 = vld [vmem:[#allocation10 + $0x38] sm:$0xff]
    %v241 = vld [vmem:[#allocation10 + $0x40] sm:$0xff]
    %v242 = vld [vmem:[#allocation10 + $0x48] sm:$0xff]
    %v243 = vld [vmem:[#allocation10 + $0x50] sm:$0xff]
    %v244 = vld [vmem:[#allocation10 + $0x58] sm:$0xff]
    %v245 = vld [vmem:[#allocation10 + $0x60] sm:$0xff]
    %v246 = vld [vmem:[#allocation10 + $0x68] sm:$0xff]
    %v247 = vld [vmem:[#allocation10 + $0x70] sm:$0xff]
    %v248 = vld [vmem:[#allocation10 + $0x78] sm:$0xff]
    %v249 = vld [vmem:[%s8] sm:$0x1]
    %v251 = vperm.slane %v249, 0
    %253 = vmatpush.msra.mxu0 %v248
    %254 = vmatpush.msra.mxu0 %v247
    %255 = vmatpush.msra.mxu0 %v246
    %256 = vmatpush.msra.mxu0 %v245
    %257 = vmatpush.msra.mxu0 %v244
    %258 = vmatpush.msra.mxu0 %v243
    %259 = vmatpush.msra.mxu0 %v242
    %260 = vmatpush.msra.mxu0 %v241
    %261 = vmatpush.msra.mxu0 %v240
    %262 = vmatpush.msra.mxu0 %v239
    %263 = vmatpush.msra.mxu0 %v238
    %264 = vmatpush.msra.mxu0 %v237
    %265 = vmatpush.msra.mxu0 %v236
    %266 = vmatpush.msra.mxu0 %v235
    %267 = vmatpush.msra.mxu0 %v234
    %268 = vmatpush.msra.mxu0 %v233
    %269 = vmatmul.f32.gmra.mxu0 %v232
    %v270 = vpop.f32.mrf.mxu0
    %v271 = vadd.f32 %v251, %v270
    %272 = vdwg.mxu0
    %273 = vst [vmem:[#allocation11] sm:$0xff] %v271
    // Predicated region
    $region58: #{tpu_custom_call.1} parent=1 // pred_check
      _
    $region59: #{tpu_custom_call.1} parent=1 // pred_check_branch
      %275 = sbr.rel (0) target = $region61
    $region60: #{tpu_custom_call.1} parent=1 // pred_region
      %277 = vsyncadd [#allocation4], 0
      %s279 = sshll.u32 [#allocation11], 4
      %s280 = int_to_ptr.vmem [resolvable:$true] %s279
      %s281 = sshll.u32 %s9, 4
      %s282 = int_to_ptr.hbm [resolvable:$true] %s281
      %284 = dma.vmem_to_hbm [thread:$0]  %s280, 128, %s282, [#allocation4]
    $region61: #{tpu_custom_call.1} parent=1 // pred_fallthru
      _
    // Predicated region
    $region62: #{tpu_custom_call.1} parent=1 // pred_check
      _
    $region63: #{tpu_custom_call.1} parent=1 // pred_check_branch
      %286 = sbr.rel (0) target = $region65
    $region64: #{tpu_custom_call.1} parent=1 // pred_region
      %288 = dma.done [#allocation4], 128
    $region65: #{tpu_custom_call.1} parent=1 // pred_fallthru
      _
    %289 = vsyncpa [#allocation3], 1
    %290 = vsyncpa [#allocation6], 1
    %291 = vsyncpa [#allocation9], 1
    %292 = vsyncpa [#allocation4], 1

// kernel: tpu_custom_call.1
$region0: #{tpu_custom_call.1}
  #allocation0 [shape = 'u32[]', space=smem, size = 0x4, offset = 0x4, fixed_abs, tag = 'smem constant byte address 0x4 - core index']
  #allocation1 [shape = 'u32[72,128]{1,0:T(1,128)}', space=vmem, size = 0x9000, scoped, tag = 'internal scratch']
  %s0 = inlined_call_operand.hbm [shape: f32[8,128], index: 0, kind: input, shape index: {}]
  %s1 = inlined_call_operand.hbm [shape: f32[128,128], index: 1, kind: input, shape index: {}]
  %s2 = inlined_call_operand.vmem [shape: f32[1,128], index: 2, kind: input, shape index: {}]
  %s3 = inlined_call_operand.hbm [shape: f32[128,128], index: 3, kind: input, shape index: {}]
  %s4 = inlined_call_operand.vmem [shape: f32[1,128], index: 4, kind: input, shape index: {}]
  %s5 = inlined_call_operand.hbm [shape: f32[128,128], index: 5, kind: input, shape index: {}]
  %s6 = inlined_call_operand.vmem [shape: f32[1,128], index: 6, kind: input, shape index: {}]
  %s7 = inlined_call_operand.hbm [shape: f32[128,128], index: 7, kind: input, shape index: {}]
  %s8 = inlined_call_operand.vmem [shape: f32[1,128], index: 8, kind: input, shape index: {}]
  %s9 = inlined_call_operand.hbm [shape: f32[8,128], index: 9, kind: output, shape index: {}]
  %s10 = sld [smem:[#allocation0]]
  $region66: #{tpu_custom_call.1} parent=0
    _
  %s12 = ssub.s32 1, %s10
  %s13 = scalar_select 0, %s12, %s10
  $region1: #{tpu_custom_call.1} parent=0
    #allocation2 [shape = 'u8[4096]{0}', space=vmem, size = 0x1000, scoped, tag = 'input window, operand 0, single buffered']
    #allocation3 [shape = 's32[1]{0}', space=sflag, size = 0x4, scoped, tag = 'scoped memory for tpu_custom_call.1']
    #allocation4 [shape = 's32[1]{0}', space=sflag, size = 0x4, scoped, tag = 'scoped memory for tpu_custom_call.1']
    #allocation5 [shape = 'u8[65536]{0}', space=vmem, size = 0x10000, scoped, tag = 'input window, operand 1, single buffered']
    #allocation6 [shape = 's32[1]{0}', space=sflag, size = 0x4, scoped, tag = 'scoped memory for tpu_custom_call.1']
    #allocation7 [shape = 'u8[65536]{0}', space=vmem, size = 0x10000, scoped, tag = 'input window, operand 3, single buffered']
    #allocation8 [shape = 'u8[65536]{0}', space=vmem, size = 0x10000, scoped, tag = 'input window, operand 5, single buffered']
    #allocation9 [shape = 's32[1]{0}', space=sflag, size = 0x4, scoped, tag = 'scoped memory for tpu_custom_call.1']
    #allocation10 [shape = 'u8[65536]{0}', space=vmem, size = 0x10000, scoped, tag = 'input window, operand 7, single buffered']
    #allocation11 [shape = 'u8[4096]{0}', space=vmem, size = 0x1000, scoped, tag = 'output window, operand 0, single buffered']
    %14 = vsyncpa [#allocation3], 0
    %15 = vsyncpa [#allocation6], 0
    %16 = vsyncpa [#allocation9], 0
    %17 = vsyncpa [#allocation4], 0
    // Predicated region
    $region2: #{tpu_custom_call.1} parent=1 // pred_check
      _
    $region3: #{tpu_custom_call.1} parent=1 // pred_check_branch
      %19 = sbr.rel (0) target = $region5
    $region4: #{tpu_custom_call.1} parent=1 // pred_region
      %21 = vsyncadd [#allocation3], 0
      %s23 = sshll.u32 %s0, 4
      %s24 = int_to_ptr.hbm [resolvable:$true] %s23
      %s25 = sshll.u32 [#allocation2], 4
      %s26 = int_to_ptr.vmem [resolvable:$true] %s25
      %28 = dma.hbm_to_vmem [thread:$0]  %s24, 128, %s26, [#allocation3]
    $region5: #{tpu_custom_call.1} parent=1 // pred_fallthru
      _
    // Predicated region
    $region6: #{tpu_custom_call.1} parent=1 // pred_check
      _
    $region7: #{tpu_custom_call.1} parent=1 // pred_check_branch
      %30 = sbr.rel (0) target = $region9
    $region8: #{tpu_custom_call.1} parent=1 // pred_region
      %32 = vsyncadd [#allocation6], 0
      %s33 = sshll.u32 %s1, 4
      %s34 = int_to_ptr.hbm [resolvable:$true] %s33
      %s35 = sshll.u32 [#allocation5], 4
      %s36 = int_to_ptr.vmem [resolvable:$true] %s35
      %41 = dma.hbm_to_vmem [thread:$0]  %s34, 2048, %s36, [#allocation6], 128, 128, 8
    $region9: #{tpu_custom_call.1} parent=1 // pred_fallthru
      _
    // Predicated region
    $region10: #{tpu_custom_call.1} parent=1 // pred_check
      _
    $region11: #{tpu_custom_call.1} parent=1 // pred_check_branch
      %43 = sbr.rel (0) target = $region13
    $region12: #{tpu_custom_call.1} parent=1 // pred_region
      _
    $region13: #{tpu_custom_call.1} parent=1 // pred_fallthru
      _
    // Predicated region
    $region14: #{tpu_custom_call.1} parent=1 // pred_check
      _
    $region15: #{tpu_custom_call.1} parent=1 // pred_check_branch
      %45 = sbr.rel (0) target = $region17
    $region16: #{tpu_custom_call.1} parent=1 // pred_region
      %47 = vsyncadd [#allocation6], 0
      %s48 = sshll.u32 %s3, 4
      %s49 = int_to_ptr.hbm [resolvable:$true] %s48
      %s50 = sshll.u32 [#allocation7], 4
      %s51 = int_to_ptr.vmem [resolvable:$true] %s50
      %56 = dma.hbm_to_vmem [thread:$0]  %s49, 2048, %s51, [#allocation6], 128, 128, 8
    $region17: #{tpu_custom_call.1} parent=1 // pred_fallthru
      _
    // Predicated region
    $region18: #{tpu_custom_call.1} parent=1 // pred_check
      _
    $region19: #{tpu_custom_call.1} parent=1 // pred_check_branch
      %58 = sbr.rel (0) target = $region21
    $region20: #{tpu_custom_call.1} parent=1 // pred_region
      _
    $region21: #{tpu_custom_call.1} parent=1 // pred_fallthru
      _
    // Predicated region
    $region22: #{tpu_custom_call.1} parent=1 // pred_check
      _
    $region23: #{tpu_custom_call.1} parent=1 // pred_check_branch
      %60 = sbr.rel (0) target = $region25
    $region24: #{tpu_custom_call.1} parent=1 // pred_region
      %62 = vsyncadd [#allocation9], 0
      %s63 = sshll.u32 %s5, 4
      %s64 = int_to_ptr.hbm [resolvable:$true] %s63
      %s65 = sshll.u32 [#allocation8], 4
      %s66 = int_to_ptr.vmem [resolvable:$true] %s65
      %71 = dma.hbm_to_vmem [thread:$0]  %s64, 2048, %s66, [#allocation9], 128, 128, 8
    $region25: #{tpu_custom_call.1} parent=1 // pred_fallthru
      _
    // Predicated region
    $region26: #{tpu_custom_call.1} parent=1 // pred_check
      _
    $region27: #{tpu_custom_call.1} parent=1 // pred_check_branch
      %73 = sbr.rel (0) target = $region29
    $region28: #{tpu_custom_call.1} parent=1 // pred_region
      _
    $region29: #{tpu_custom_call.1} parent=1 // pred_fallthru
      _
    // Predicated region
    $region30: #{tpu_custom_call.1} parent=1 // pred_check
      _
    $region31: #{tpu_custom_call.1} parent=1 // pred_check_branch
      %75 = sbr.rel (0) target = $region33
    $region32: #{tpu_custom_call.1} parent=1 // pred_region
      %77 = vsyncadd [#allocation9], 0
      %s78 = sshll.u32 %s7, 4
      %s79 = int_to_ptr.hbm [resolvable:$true] %s78
      %s80 = sshll.u32 [#allocation10], 4
      %s81 = int_to_ptr.vmem [resolvable:$true] %s80
      %86 = dma.hbm_to_vmem [thread:$0]  %s79, 2048, %s81, [#allocation9], 128, 128, 8
    $region33: #{tpu_custom_call.1} parent=1 // pred_fallthru
      _
    // Predicated region
    $region34: #{tpu_custom_call.1} parent=1 // pred_check
      _
    $region35: #{tpu_custom_call.1} parent=1 // pred_check_branch
      %88 = sbr.rel (0) target = $region37
    $region36: #{tpu_custom_call.1} parent=1 // pred_region
      _
    $region37: #{tpu_custom_call.1} parent=1 // pred_fallthru
      _
    // Predicated region
    $region38: #{tpu_custom_call.1} parent=1 // pred_check
      _
    $region39: #{tpu_custom_call.1} parent=1 // pred_check_branch
      %90 = sbr.rel (0) target = $region41
    $region40: #{tpu_custom_call.1} parent=1 // pred_region
      %92 = dma.done [#allocation3], 128
    $region41: #{tpu_custom_call.1} parent=1 // pred_fallthru
      _
    // Predicated region
    $region42: #{tpu_custom_call.1} parent=1 // pred_check
      _
    $region43: #{tpu_custom_call.1} parent=1 // pred_check_branch
      %94 = sbr.rel (0) target = $region45
    $region44: #{tpu_custom_call.1} parent=1 // pred_region
      %96 = dma.done [#allocation6], 2048
    $region45: #{tpu_custom_call.1} parent=1 // pred_fallthru
      _
    // Predicated region
    $region46: #{tpu_custom_call.1} parent=1 // pred_check
      _
    $region47: #{tpu_custom_call.1} parent=1 // pred_check_branch
      %98 = sbr.rel (0) target = $region49
    $region48: #{tpu_custom_call.1} parent=1 // pred_region
      %100 = dma.done [#allocation6], 2048
    $region49: #{tpu_custom_call.1} parent=1 // pred_fallthru
      _
    // Predicated region
    $region50: #{tpu_custom_call.1} parent=1 // pred_check
      _
    $region51: #{tpu_custom_call.1} parent=1 // pred_check_branch
      %102 = sbr.rel (0) target = $region53
    $region52: #{tpu_custom_call.1} parent=1 // pred_region
      %104 = dma.done [#allocation9], 2048
    $region53: #{tpu_custom_call.1} parent=1 // pred_fallthru
      _
    // Predicated region
    $region54: #{tpu_custom_call.1} parent=1 // pred_check
      _
    $region55: #{tpu_custom_call.1} parent=1 // pred_check_branch
      %106 = sbr.rel (0) target = $region57
    $region56: #{tpu_custom_call.1} parent=1 // pred_region
      %108 = dma.done [#allocation9], 2048
    $region57: #{tpu_custom_call.1} parent=1 // pred_fallthru
      _
    %v109 = vld [vmem:[#allocation2] sm:$0xff]
    %v110 = vld [vmem:[#allocation5] sm:$0xff]
    %v111 = vld [vmem:[#allocation5 + $0x8] sm:$0xff]
    %v112 = vld [vmem:[#allocation5 + $0x10] sm:$0xff]
    %v113 = vld [vmem:[#allocation5 + $0x18] sm:$0xff]
    %v114 = vld [vmem:[#allocation5 + $0x20] sm:$0xff]
    %v115 = vld [vmem:[#allocation5 + $0x28] sm:$0xff]
    %v116 = vld [vmem:[#allocation5 + $0x30] sm:$0xff]
    %v117 = vld [vmem:[#allocation5 + $0x38] sm:$0xff]
    %v118 = vld [vmem:[#allocation5 + $0x40] sm:$0xff]
    %v119 = vld [vmem:[#allocation5 + $0x48] sm:$0xff]
    %v120 = vld [vmem:[#allocation5 + $0x50] sm:$0xff]
    %v121 = vld [vmem:[#allocation5 + $0x58] sm:$0xff]
    %v122 = vld [vmem:[#allocation5 + $0x60] sm:$0xff]
    %v123 = vld [vmem:[#allocation5 + $0x68] sm:$0xff]
    %v124 = vld [vmem:[#allocation5 + $0x70] sm:$0xff]
    %v125 = vld [vmem:[#allocation5 + $0x78] sm:$0xff]
    %v126 = vld [vmem:[%s2] sm:$0x1]
    %v128 = vperm.slane %v126, 0
    %130 = vmatpush.msra.mxu0 %v125
    %131 = vmatpush.msra.mxu0 %v124
    %132 = vmatpush.msra.mxu0 %v123
    %133 = vmatpush.msra.mxu0 %v122
    %134 = vmatpush.msra.mxu0 %v121
    %135 = vmatpush.msra.mxu0 %v120
    %136 = vmatpush.msra.mxu0 %v119
    %137 = vmatpush.msra.mxu0 %v118
    %138 = vmatpush.msra.mxu0 %v117
    %139 = vmatpush.msra.mxu0 %v116
    %140 = vmatpush.msra.mxu0 %v115
    %141 = vmatpush.msra.mxu0 %v114
    %142 = vmatpush.msra.mxu0 %v113
    %143 = vmatpush.msra.mxu0 %v112
    %144 = vmatpush.msra.mxu0 %v111
    %145 = vmatpush.msra.mxu0 %v110
    %146 = vmatmul.f32.gmra.mxu0 %v109
    %v147 = vpop.f32.mrf.mxu0
    %v148 = vadd.f32 %v128, %v147
    %149 = vdwg.mxu0
    %v150 = vmax.f32 %v148, 0.0
    %v151 = vld [vmem:[#allocation7] sm:$0xff]
    %v152 = vld [vmem:[#allocation7 + $0x8] sm:$0xff]
    %v153 = vld [vmem:[#allocation7 + $0x10] sm:$0xff]
    %v154 = vld [vmem:[#allocation7 + $0x18] sm:$0xff]
    %v155 = vld [vmem:[#allocation7 + $0x20] sm:$0xff]
    %v156 = vld [vmem:[#allocation7 + $0x28] sm:$0xff]
    %v157 = vld [vmem:[#allocation7 + $0x30] sm:$0xff]
    %v158 = vld [vmem:[#allocation7 + $0x38] sm:$0xff]
    %v159 = vld [vmem:[#allocation7 + $0x40] sm:$0xff]
    %v160 = vld [vmem:[#allocation7 + $0x48] sm:$0xff]
    %v161 = vld [vmem:[#allocation7 + $0x50] sm:$0xff]
    %v162 = vld [vmem:[#allocation7 + $0x58] sm:$0xff]
    %v163 = vld [vmem:[#allocation7 + $0x60] sm:$0xff]
    %v164 = vld [vmem:[#allocation7 + $0x68] sm:$0xff]
    %v165 = vld [vmem:[#allocation7 + $0x70] sm:$0xff]
    %v166 = vld [vmem:[#allocation7 + $0x78] sm:$0xff]
    %v167 = vld [vmem:[%s4] sm:$0x1]
    %v169 = vperm.slane %v167, 0
    %171 = vmatpush.msra.mxu0 %v166
    %172 = vmatpush.msra.mxu0 %v165
    %173 = vmatpush.msra.mxu0 %v164
    %174 = vmatpush.msra.mxu0 %v163
    %175 = vmatpush.msra.mxu0 %v162
    %176 = vmatpush.msra.mxu0 %v161
    %177 = vmatpush.msra.mxu0 %v160
    %178 = vmatpush.msra.mxu0 %v159
    %179 = vmatpush.msra.mxu0 %v158
    %180 = vmatpush.msra.mxu0 %v157
    %181 = vmatpush.msra.mxu0 %v156
    %182 = vmatpush.msra.mxu0 %v155
    %183 = vmatpush.msra.mxu0 %v154
    %184 = vmatpush.msra.mxu0 %v153
    %185 = vmatpush.msra.mxu0 %v152
    %186 = vmatpush.msra.mxu0 %v151
    %187 = vmatmul.f32.gmra.mxu0 %v150
    %v188 = vpop.f32.mrf.mxu0
    %v189 = vadd.f32 %v169, %v188
    %190 = vdwg.mxu0
    %v191 = vmax.f32 %v189, 0.0
    %v192 = vld [vmem:[#allocation8] sm:$0xff]
    %v193 = vld [vmem:[#allocation8 + $0x8] sm:$0xff]
    %v194 = vld [vmem:[#allocation8 + $0x10] sm:$0xff]
    %v195 = vld [vmem:[#allocation8 + $0x18] sm:$0xff]
    %v196 = vld [vmem:[#allocation8 + $0x20] sm:$0xff]
    %v197 = vld [vmem:[#allocation8 + $0x28] sm:$0xff]
    %v198 = vld [vmem:[#allocation8 + $0x30] sm:$0xff]
    %v199 = vld [vmem:[#allocation8 + $0x38] sm:$0xff]
    %v200 = vld [vmem:[#allocation8 + $0x40] sm:$0xff]
    %v201 = vld [vmem:[#allocation8 + $0x48] sm:$0xff]
    %v202 = vld [vmem:[#allocation8 + $0x50] sm:$0xff]
    %v203 = vld [vmem:[#allocation8 + $0x58] sm:$0xff]
    %v204 = vld [vmem:[#allocation8 + $0x60] sm:$0xff]
    %v205 = vld [vmem:[#allocation8 + $0x68] sm:$0xff]
    %v206 = vld [vmem:[#allocation8 + $0x70] sm:$0xff]
    %v207 = vld [vmem:[#allocation8 + $0x78] sm:$0xff]
    %v208 = vld [vmem:[%s6] sm:$0x1]
    %v210 = vperm.slane %v208, 0
    %212 = vmatpush.msra.mxu0 %v207
    %213 = vmatpush.msra.mxu0 %v206
    %214 = vmatpush.msra.mxu0 %v205
    %215 = vmatpush.msra.mxu0 %v204
    %216 = vmatpush.msra.mxu0 %v203
    %217 = vmatpush.msra.mxu0 %v202
    %218 = vmatpush.msra.mxu0 %v201
    %219 = vmatpush.msra.mxu0 %v200
    %220 = vmatpush.msra.mxu0 %v199
    %221 = vmatpush.msra.mxu0 %v198
    %222 = vmatpush.msra.mxu0 %v197
    %223 = vmatpush.msra.mxu0 %v196
    %224 = vmatpush.msra.mxu0 %v195
    %225 = vmatpush.msra.mxu0 %v194
    %226 = vmatpush.msra.mxu0 %v193
    %227 = vmatpush.msra.mxu0 %v192
    %228 = vmatmul.f32.gmra.mxu0 %v191
    %v229 = vpop.f32.mrf.mxu0
    %v230 = vadd.f32 %v210, %v229
    %231 = vdwg.mxu0
    %v232 = vmax.f32 %v230, 0.0
    %v233 = vld [vmem:[#allocation10] sm:$0xff]
    %v234 = vld [vmem:[#allocation10 + $0x8] sm:$0xff]
    %v235 = vld [vmem:[#allocation10 + $0x10] sm:$0xff]
    %v236 = vld [vmem:[#allocation10 + $0x18] sm:$0xff]
    %v237 = vld [vmem:[#allocation10 + $0x20] sm:$0xff]
    %v238 = vld [vmem:[#allocation10 + $0x28] sm:$0xff]
    %v239 = vld [vmem:[#allocation10 + $0x30] sm:$0xff]
    %v240 = vld [vmem:[#allocation10 + $0x38] sm:$0xff]
    %v241 = vld [vmem:[#allocation10 + $0x40] sm:$0xff]
    %v242 = vld [vmem:[#allocation10 + $0x48] sm:$0xff]
    %v243 = vld [vmem:[#allocation10 + $0x50] sm:$0xff]
    %v244 = vld [vmem:[#allocation10 + $0x58] sm:$0xff]
    %v245 = vld [vmem:[#allocation10 + $0x60] sm:$0xff]
    %v246 = vld [vmem:[#allocation10 + $0x68] sm:$0xff]
    %v247 = vld [vmem:[#allocation10 + $0x70] sm:$0xff]
    %v248 = vld [vmem:[#allocation10 + $0x78] sm:$0xff]
    %v249 = vld [vmem:[%s8] sm:$0x1]
    %v251 = vperm.slane %v249, 0
    %253 = vmatpush.msra.mxu0 %v248
    %254 = vmatpush.msra.mxu0 %v247
    %255 = vmatpush.msra.mxu0 %v246
    %256 = vmatpush.msra.mxu0 %v245
    %257 = vmatpush.msra.mxu0 %v244
    %258 = vmatpush.msra.mxu0 %v243
    %259 = vmatpush.msra.mxu0 %v242
    %260 = vmatpush.msra.mxu0 %v241
    %261 = vmatpush.msra.mxu0 %v240
    %262 = vmatpush.msra.mxu0 %v239
    %263 = vmatpush.msra.mxu0 %v238
    %264 = vmatpush.msra.mxu0 %v237
    %265 = vmatpush.msra.mxu0 %v236
    %266 = vmatpush.msra.mxu0 %v235
    %267 = vmatpush.msra.mxu0 %v234
    %268 = vmatpush.msra.mxu0 %v233
    %269 = vmatmul.f32.gmra.mxu0 %v232
    %v270 = vpop.f32.mrf.mxu0
    %v271 = vadd.f32 %v251, %v270
    %272 = vdwg.mxu0
    %273 = vst [vmem:[#allocation11] sm:$0xff] %v271
    // Predicated region
    $region58: #{tpu_custom_call.1} parent=1 // pred_check
      _
    $region59: #{tpu_custom_call.1} parent=1 // pred_check_branch
      %275 = sbr.rel (0) target = $region61
    $region60: #{tpu_custom_call.1} parent=1 // pred_region
      %277 = vsyncadd [#allocation4], 0
      %s279 = sshll.u32 [#allocation11], 4
      %s280 = int_to_ptr.vmem [resolvable:$true] %s279
      %s281 = sshll.u32 %s9, 4
      %s282 = int_to_ptr.hbm [resolvable:$true] %s281
      %284 = dma.vmem_to_hbm [thread:$0]  %s280, 128, %s282, [#allocation4]
    $region61: #{tpu_custom_call.1} parent=1 // pred_fallthru
      _
    // Predicated region
    $region62: #{tpu_custom_call.1} parent=1 // pred_check
      _
    $region63: #{tpu_custom_call.1} parent=1 // pred_check_branch
      %286 = sbr.rel (0) target = $region65
    $region64: #{tpu_custom_call.1} parent=1 // pred_region
      %288 = dma.done [#allocation4], 128
    $region65: #{tpu_custom_call.1} parent=1 // pred_fallthru
      _
    %289 = vsyncpa [#allocation3], 1
    %290 = vsyncpa [#allocation6], 1
    %291 = vsyncpa [#allocation9], 1
    %292 = vsyncpa [#allocation4], 1

</llo_original>
